<compile_context>
chip_gen: v6e
topology: v6e:2x2x1
jax: 0.10.0
libtpu: 0.0.40
codegen_flags: <defaults>
</compile_context>

<pallas_src>
import functools
import math

import jax
import jax.numpy as jnp
import numpy as np
from jax.experimental import pallas as pl
from jax.experimental.pallas import tpu as pltpu


def _round_up(x, m):
    return ((x + m - 1) // m) * m


def _ls_kl_kernel(logp_ref, tgt_ref, loss_ref, *, sv, confidence, ignore_index,
                  ignore_col, block_v, vocab_size, ign_tile, ign_local,
                  h_generic, h_tgt_on_ignore):
    """Grid = (batch tiles [parallel], vocab tiles [arbitrary]).

    Writes one scalar partial of sum(p * (log p - output)) per grid step.
    """
    k = pl.program_id(1)                                  # vocab-tile index

    logp = logp_ref[...].astype(jnp.float32)              # (TB, TV) model log-probs
    tgt = tgt_ref[...]                                     # (TB, 1)  int32 target ids

    # Global column id of every lane in this vocab tile.
    col = jax.lax.broadcasted_iota(jnp.int32, logp.shape, 1)
    if block_v != vocab_size:                              # compile-time branch
        col = col + k * block_v
    if vocab_size % block_v != 0:                          # compile-time branch
        # The last vocab tile reads past V; those lanes carry garbage -> zero them.
        logp = jnp.where(col < vocab_size, logp, 0.0)

    # Fused weighted reduce: p_j = sv everywhere except `confidence` at j == target.
    w = jnp.where(col == tgt, jnp.float32(confidence), jnp.float32(sv))
    cross = jnp.sum(logp * w, axis=-1, keepdims=True)      # (TB, 1) partial sum_j p_j*logp_j

    # The ignore column actually carries probability 0 (unless it IS the target).
    # It lives in exactly one compile-time-known vocab tile; read it as a static
    # O(TB) column slice from the ref and subtract the sv contribution added above.
    ign_lp = logp_ref[:, ign_local:ign_local + 1].astype(jnp.float32)   # (TB, 1)
    hit = jnp.logical_and(k == ign_tile, tgt != ignore_col)
    cross = cross - jnp.where(hit, jnp.float32(sv) * ign_lp, 0.0)

    # Rows whose target is ignore_index contribute nothing; this also masks padded /
    # out-of-bounds tail rows (their target was padded with ignore_index).
    valid = tgt != ignore_index
    partial = jnp.sum(jnp.where(valid, -cross, 0.0))

    # sum_j p_j * log(p_j) only takes two values -> compile-time constants; fold it in
    # exactly once per batch tile (on the first vocab tile).
    ent = jnp.where(tgt == ignore_col, jnp.float32(h_tgt_on_ignore),
                    jnp.float32(h_generic))
    ent_sum = jnp.sum(jnp.where(valid, ent, 0.0))
    partial = partial + jnp.where(k == 0, ent_sum, jnp.float32(0.0))

    loss_ref[0, 0] = partial


def label_smoothing_loss(output, target, *, label_smoothing, tgt_vocab_size,
                         ignore_index=-100, block_b=None, block_v=None):
    """output: [B, V] log-probs (f32 or bf16 -- bf16 preferred, the kernel upcasts
    in-register and the op is HBM-streaming); target: [B] int. Returns scalar f32."""
    assert 0.0 < label_smoothing <= 1.0
    B, V = output.shape
    assert V == tgt_vocab_size
    if not (-V <= ignore_index < V):
        # torch's `one_hot[ignore_index] = 0` would raise IndexError here too.
        raise ValueError(f"ignore_index={ignore_index} out of range for vocab size {V}")
    ignore_col = int(ignore_index) % V          # negative indices wrap like torch indexing

    sv = float(label_smoothing) / (tgt_vocab_size - 2)
    confidence = 1.0 - float(label_smoothing)
    conf_log_conf = confidence * math.log(confidence) if confidence > 0.0 else 0.0
    sv_log_sv = sv * math.log(sv)
    h_generic = conf_log_conf + (V - 2) * sv_log_sv        # target != ignore column
    h_tgt_on_ignore = conf_log_conf + (V - 1) * sv_log_sv  # confidence landed on ignore col

    itemsize = jnp.dtype(output.dtype).itemsize
    # Working-set bytes/element: double-buffered input + f32 upcast + iota/compare temps.
    work_bytes = 2 * itemsize + 8

    try:
        vmem_cap = int(getattr(pltpu.get_tpu_info(), "vmem_capacity_bytes", 64 << 20))
    except Exception:
        vmem_cap = 64 << 20                      # conservative default (v7x per-core VMEM)
    budget = vmem_cap // 2                       # sizing budget, below the requested limit

    # ---- vocab tiling (second, "arbitrary" grid axis) for very large V --------------
    if block_v is None:
        if V * work_bytes * 32 <= budget:
            block_v = V                          # whole vocab fits with >= 32 rows
        else:
            block_v = max(128, (budget // (work_bytes * 32)) // 128 * 128)
            block_v = min(block_v, V)
    block_v = int(block_v)
    n_v_tiles = -(-V // block_v)

    # ---- batch tiling ----------------------------------------------------------------
    if block_b is None:
        row_bytes = block_v * work_bytes
        max_bb = max(8, budget // row_bytes)
        # Bytes-based target: ~8 MiB of raw input per tile amortizes the ~0.35us/step
        # grid overhead (no fixed 1024-row cap).
        target_bb = max(8, (8 << 20) // max(1, block_v * itemsize))
        block_b = min(max_bb, target_bb)
        if B >= 64:
            block_b = min(block_b, -(-B // 2))   # >= 2 batch tiles -> both v7x TensorCores
    block_b = int(block_b)
    if block_b >= B:
        block_b = B                              # single full-batch tile (always legal)
    elif block_b >= 32:
        block_b = (block_b // 32) * 32           # multiple of 32: safe for every dtype
    else:
        block_b = max(8, (block_b // 8) * 8)
    n_b_tiles = -(-B // block_b)
    Bp = n_b_tiles * block_b

    # Pad only the tiny target vector; padded rows get ignore_index, which zeroes their
    # contribution in-kernel (the big [B, V] array is never copied/padded on the host).
    tgt2d = jnp.pad(target.astype(jnp.int32), (0, Bp - B),
                    constant_values=ignore_index).reshape(Bp, 1)

    kernel = functools.partial(
        _ls_kl_kernel, sv=sv, confidence=confidence, ignore_index=int(ignore_index),
        ignore_col=ignore_col, block_v=block_v, vocab_size=V,
        ign_tile=ignore_col // block_v, ign_local=ignore_col % block_v,
        h_generic=h_generic, h_tgt_on_ignore=h_tgt_on_ignore)

    need = 2 * block_b * block_v * itemsize + block_b * block_v * 8 + (2 << 20)
    vmem_limit = int(min((vmem_cap * 4) // 5, max(32 << 20, need)))

    partials = pl.pallas_call(
        kernel,
        out_shape=jax.ShapeDtypeStruct((n_b_tiles, n_v_tiles), jnp.float32),
        grid=(n_b_tiles, n_v_tiles),
        in_specs=[
            pl.BlockSpec((block_b, block_v), lambda i, k: (i, k)),
            pl.BlockSpec((block_b, 1), lambda i, k: (i, 0)),
        ],
        out_specs=pl.BlockSpec((1, 1), lambda i, k: (i, k),
                               memory_space=pltpu.MemorySpace.SMEM),
        compiler_params=pltpu.CompilerParams(
            dimension_semantics=("parallel", "arbitrary"),  # batch tiles independent
            vmem_limit_bytes=vmem_limit),
    )(output, tgt2d)
    return jnp.sum(partials)


if __name__ == "__main__":
    key = jax.random.PRNGKey(0)
    B, V = 16, 32                      # batch_size x n_classes (tgt_vocab_size)
    label_smoothing = 0.1
    ignore_index = 0                   # e.g. padding token id

    k1, k2 = jax.random.split(key)
    logits = jax.random.normal(k1, (B, V), dtype=jnp.float32)
    log_probs = jax.nn.log_softmax(logits, axis=-1)          # "output" (log-space)
    target = jax.random.randint(k2, (B,), 0, V, dtype=jnp.int32)

    loss = label_smoothing_loss(
        log_probs, target,
        label_smoothing=label_smoothing,
        tgt_vocab_size=V,
        ignore_index=ignore_index,
    )
    loss = jax.block_until_ready(loss)

    # Plain-numpy reference of the PyTorch forward.
    sv = label_smoothing / (V - 2)
    conf = 1.0 - label_smoothing
    one_hot = np.full((V,), sv, dtype=np.float32)
    one_hot[ignore_index] = 0.0
    mp = np.tile(one_hot[None, :], (B, 1))
    t = np.asarray(target)
    mp[np.arange(B), t] = conf
    mp[t == ignore_index] = 0.0
    lp = np.asarray(log_probs)
    with np.errstate(divide="ignore", invalid="ignore"):
        ref = np.where(mp > 0, mp * (np.log(mp) - lp), 0.0).sum()

    assert np.allclose(float(loss), float(ref), rtol=1e-5, atol=1e-4), (float(loss), float(ref))
    print("KERNEL_OK")
</pallas_src>

<mosaic_0001>
module attributes {stable_mosaic.version = 11 : i64} {
  func.func @_ls_kl_kernel(%arg0: i32, %arg1: i32, %arg2: memref<16x32xf32, #tpu.memory_space<vmem>>, %arg3: memref<16x1xi32, #tpu.memory_space<vmem>>, %arg4: memref<1x1xf32, #tpu.memory_space<smem>>) attributes {dimension_semantics = [#tpu.dimension_semantics<parallel>, #tpu.dimension_semantics<arbitrary>], iteration_bounds = array<i64: 1, 1>, scalar_prefetch = 0 : i64, scratch_operands = 0 : i64, tpu.core_type = #tpu.core_type<tc>, window_params = [{transform_indices = @transform_0, window_bounds = array<i64: 16, 32>}, {transform_indices = @transform_1, window_bounds = array<i64: 16, 1>}, {transform_indices = @transform_2, window_bounds = array<i64: 1, 1>}]} {
    %c0 = arith.constant 0 : index
    %c0_0 = arith.constant 0 : index
    %0 = vector.load %arg2[%c0, %c0_0] : memref<16x32xf32, #tpu.memory_space<vmem>>, vector<16x32xf32>
    %c0_1 = arith.constant 0 : index
    %c0_2 = arith.constant 0 : index
    %1 = vector.load %arg3[%c0_1, %c0_2] : memref<16x1xi32, #tpu.memory_space<vmem>>, vector<16x1xi32>
    %2 = tpu.iota {dimensions = array<i32: 1>} : vector<16x32xi32>
    %3 = vector.broadcast %1 : vector<16x1xi32> to vector<16x32xi32>
    %4 = arith.cmpi eq, %2, %3 : vector<16x32xi32>
    %cst = arith.constant 0.899999976 : f32
    %cst_3 = arith.constant 0.00333333341 : f32
    %5 = vector.broadcast %cst : f32 to vector<16x32xf32>
    %6 = vector.broadcast %cst_3 : f32 to vector<16x32xf32>
    %7 = arith.select %4, %5, %6 : vector<16x32xi1>, vector<16x32xf32>
    %8 = arith.mulf %0, %7 : vector<16x32xf32>
    %cst_4 = arith.constant dense<0.000000e+00> : vector<16xf32>
    %9 = vector.multi_reduction <add>, %8, %cst_4 [1] : vector<16x32xf32> to vector<16xf32>
    %10 = vector.shape_cast %9 : vector<16xf32> to vector<16x1xf32>
    %c0_5 = arith.constant 0 : index
    %c0_6 = arith.constant 0 : index
    %11 = vector.load %arg2[%c0_5, %c0_6] : memref<16x32xf32, #tpu.memory_space<vmem>>, vector<16x1xf32>
    %c0_i32 = arith.constant 0 : i32
    %12 = arith.cmpi eq, %arg1, %c0_i32 : i32
    %c0_i32_7 = arith.constant 0 : i32
    %13 = vector.broadcast %c0_i32_7 : i32 to vector<16x1xi32>
    %14 = arith.cmpi ne, %1, %13 : vector<16x1xi32>
    %15 = vector.broadcast %12 : i1 to vector<16x1xi1>
    %16 = arith.andi %15, %14 : vector<16x1xi1>
    %cst_8 = arith.constant 0.00333333341 : f32
    %17 = vector.broadcast %cst_8 : f32 to vector<16x1xf32>
    %18 = arith.mulf %17, %11 : vector<16x1xf32>
    %cst_9 = arith.constant 0.000000e+00 : f32
    %19 = vector.broadcast %cst_9 : f32 to vector<16x1xf32>
    %20 = arith.select %16, %18, %19 : vector<16x1xi1>, vector<16x1xf32>
    %21 = arith.subf %10, %20 : vector<16x1xf32>
    %c0_i32_10 = arith.constant 0 : i32
    %22 = vector.broadcast %c0_i32_10 : i32 to vector<16x1xi32>
    %23 = arith.cmpi ne, %1, %22 : vector<16x1xi32>
    %cst_11 = arith.constant 0.000000e+00 : f32
    %24 = vector.broadcast %cst_11 : f32 to vector<16x1xf32>
    %25 = arith.subf %24, %21 : vector<16x1xf32>
    %cst_12 = arith.constant 0.000000e+00 : f32
    %26 = vector.broadcast %cst_12 : f32 to vector<16x1xf32>
    %27 = arith.select %23, %25, %26 : vector<16x1xi1>, vector<16x1xf32>
    %28 = vector.shape_cast %27 : vector<16x1xf32> to vector<1x16x1xf32>
    %cst_13 = arith.constant dense<0.000000e+00> : vector<1xf32>
    %29 = vector.multi_reduction <add>, %28, %cst_13 [1, 2] : vector<1x16x1xf32> to vector<1xf32>
    %30 = vector.shape_cast %29 : vector<1xf32> to vector<1x1x1xf32>
    %31 = vector.extract %30[0, 0, 0] : f32 from vector<1x1x1xf32>
    %c0_i32_14 = arith.constant 0 : i32
    %32 = vector.broadcast %c0_i32_14 : i32 to vector<16x1xi32>
    %33 = arith.cmpi eq, %1, %32 : vector<16x1xi32>
    %cst_15 = arith.constant -0.684215307 : f32
    %cst_16 = arith.constant -0.665202737 : f32
    %34 = vector.broadcast %cst_15 : f32 to vector<16x1xf32>
    %35 = vector.broadcast %cst_16 : f32 to vector<16x1xf32>
    %36 = arith.select %33, %34, %35 : vector<16x1xi1>, vector<16x1xf32>
    %cst_17 = arith.constant 0.000000e+00 : f32
    %37 = vector.broadcast %cst_17 : f32 to vector<16x1xf32>
    %38 = arith.select %23, %36, %37 : vector<16x1xi1>, vector<16x1xf32>
    %39 = vector.shape_cast %38 : vector<16x1xf32> to vector<1x16x1xf32>
    %cst_18 = arith.constant dense<0.000000e+00> : vector<1xf32>
    %40 = vector.multi_reduction <add>, %39, %cst_18 [1, 2] : vector<1x16x1xf32> to vector<1xf32>
    %41 = vector.shape_cast %40 : vector<1xf32> to vector<1x1x1xf32>
    %42 = vector.extract %41[0, 0, 0] : f32 from vector<1x1x1xf32>
    %c0_i32_19 = arith.constant 0 : i32
    %43 = arith.cmpi eq, %arg1, %c0_i32_19 : i32
    %cst_20 = arith.constant 0.000000e+00 : f32
    %44 = arith.select %43, %42, %cst_20 : f32
    %45 = arith.addf %31, %44 : f32
    %c0_21 = arith.constant 0 : index
    %c0_22 = arith.constant 0 : index
    %46 = memref.load %arg4[%c0_21, %c0_22] : memref<1x1xf32, #tpu.memory_space<smem>>
    memref.store %45, %arg4[%c0_21, %c0_22] : memref<1x1xf32, #tpu.memory_space<smem>>
    return
  }
  func.func @transform_0(%arg0: i32, %arg1: i32) -> (i32, i32) {
    %c0_i32 = arith.constant 0 : i32
    return %arg0, %arg1 : i32, i32
  }
  func.func @transform_1(%arg0: i32, %arg1: i32) -> (i32, i32) {
    %c0_i32 = arith.constant 0 : i32
    %c0_i32_0 = arith.constant 0 : i32
    return %arg0, %c0_i32 : i32, i32
  }
  func.func @transform_2(%arg0: i32, %arg1: i32) -> (i32, i32) {
    %c0_i32 = arith.constant 0 : i32
    return %arg0, %arg1 : i32, i32
  }
}

</mosaic_0001>

<llo_original>
// kernel: tpu_custom_call.1
$region0: #{tpu_custom_call.1}
  #allocation0 [shape = 'u32[]', space=smem, size = 0x4, offset = 0x4, fixed_abs, tag = 'smem constant byte address 0x4 - core index']
  #allocation1 [shape = 'u32[144,128]{1,0:T(1,128)}', space=vmem, size = 0x12000, scoped, tag = 'internal scratch']
  %s0 = inlined_call_operand.vmem [shape: f32[16,32], index: 0, kind: input, shape index: {}]
  %s1 = inlined_call_operand.vmem [shape: s32[16,1], index: 1, kind: input, shape index: {}]
  %s2 = inlined_call_operand.hbm [shape: f32[1,1], index: 2, kind: output, shape index: {}]
  %s3 = sld [smem:[#allocation0]]
  $region18: #{tpu_custom_call.1} parent=0
    _
  %s5 = ssub.s32 1, %s3
  %s6 = scalar_select 0, %s5, %s3
  $region1: #{tpu_custom_call.1} parent=0
    #allocation2 [shape = 'u8[512]{0}', space=smem, size = 0x200, scoped, tag = 'output window, operand 0, single buffered']
    #allocation3 [shape = 's32[1]{0}', space=sflag, size = 0x4, scoped, tag = 'scoped memory for tpu_custom_call.1']
    %7 = vsyncpa [#allocation3], 0
    // Predicated region
    $region2: #{tpu_custom_call.1} parent=1 // pred_check
      _
    $region3: #{tpu_custom_call.1} parent=1 // pred_check_branch
      %9 = sbr.rel (0) target = $region5
    $region4: #{tpu_custom_call.1} parent=1 // pred_region
      _
    $region5: #{tpu_custom_call.1} parent=1 // pred_fallthru
      _
    // Predicated region
    $region6: #{tpu_custom_call.1} parent=1 // pred_check
      _
    $region7: #{tpu_custom_call.1} parent=1 // pred_check_branch
      %11 = sbr.rel (0) target = $region9
    $region8: #{tpu_custom_call.1} parent=1 // pred_region
      _
    $region9: #{tpu_custom_call.1} parent=1 // pred_fallthru
      _
    %v12 = vld [vmem:[%s0] sm:$0xff]
    %v13 = vld [vmem:[%s0 + $0x8] sm:$0xff]
    %v14 = vld [vmem:[%s1] sm:$0xff]
    %v15 = vld [vmem:[%s1 + $0x8] sm:$0xff]
    %v16 = vlaneseq
    %v17 = vand.u32 %v16, 127
    %18 = vset.pattern.permute.xlu0 0
    %19 = vperm.xlu0 %18, %v14
    %v20 = vpop.permute.xlu0 %19
    %21 = vset.pattern.permute.xlu0 0
    %22 = vperm.xlu0 %21, %v15
    %v23 = vpop.permute.xlu0 %22
    %vm24 = vcmp.eq.s32.totalorder %v17, %v20
    %vm25 = vcmp.eq.s32.totalorder %v17, %v23
    %v26 = vsel %vm24, 0.9, 0.0033333334
    %v27 = vsel %vm25, 0.9, 0.0033333334
    %v28 = vmul.f32 %v12, %v26
    %v29 = vmul.f32 %v13, %v27
    %vm30 = vcmask 261120
    %v31 = vsel %vm30, %v28, 0.0
    %32 = vadd.xlane.f32.xlu0 %v31
    %v33 = vpop.xlane.xlu0 %32
    %v34 = vsel %vm30, %v29, 0.0
    %35 = vadd.xlane.f32.xlu0 %v34
    %v36 = vpop.xlane.xlu0 %35
    %p37 = scmp.eq.s32.totalorder 0, 0
    %vm38 = vcmp.ne.s32.totalorder %v14, 0
    %vm39 = vcmp.ne.s32.totalorder %v15, 0
    %s40 = scalar_select %p37, 1, 0
    %v41 = vstv %s40
    %vm42 = vcmp.eq.s32.totalorder %v41, 1
    %vm43 = vmand %vm42, %vm38
    %vm44 = vmand %vm42, %vm39
    %v45 = vmul.f32 %v12, 0.0033333334
    %v46 = vmul.f32 %v13, 0.0033333334
    %v47 = vsel %vm43, %v45, 0.0
    %v48 = vsel %vm44, %v46, 0.0
    %v49 = vsub.f32 %v33, %v47
    %v50 = vsub.f32 %v36, %v48
    %v51 = vsub.f32 0.0, %v49
    %v52 = vsub.f32 0.0, %v50
    %v53 = vsel %vm38, %v51, 0.0
    %v54 = vsel %vm39, %v52, 0.0
    %vm55 = vcmask 7168
    %v56 = vsel %vm55, %v53, 0.0
    %v57 = vsel %vm55, %v54, 0.0
    %v58 = vadd.f32 %v56, %v57
    %59 = vadd.xlane.f32.xlu0 %v58
    %v60 = vpop.xlane.xlu0 %59
    %v61 = vrot.slane %v60, 4
    %v62 = vadd.f32 %v60, %v61
    %v63 = vrot.slane %v62, 2
    %v64 = vadd.f32 %v62, %v63
    %v65 = vrot.slane %v64, 1
    %v66 = vadd.f32 %v64, %v65
    %s67 = vtos %v66
    %vm68 = vcmp.eq.s32.totalorder %v14, 0
    %vm69 = vcmp.eq.s32.totalorder %v15, 0
    %v70 = vsel %vm68, -0.6842153, -0.66520274
    %v71 = vsel %vm69, -0.6842153, -0.66520274
    %v72 = vsel %vm38, %v70, 0.0
    %v73 = vsel %vm39, %v71, 0.0
    %v74 = vsel %vm55, %v72, 0.0
    %v75 = vsel %vm55, %v73, 0.0
    %v76 = vadd.f32 %v74, %v75
    %77 = vadd.xlane.f32.xlu0 %v76
    %v78 = vpop.xlane.xlu0 %77
    %v79 = vrot.slane %v78, 4
    %v80 = vadd.f32 %v78, %v79
    %v81 = vrot.slane %v80, 2
    %v82 = vadd.f32 %v80, %v81
    %v83 = vrot.slane %v82, 1
    %v84 = vadd.f32 %v82, %v83
    %s85 = vtos %v84
    %s86 = scalar_select %p37, %s85, 0.0
    %s87 = sadd.f32 %s67, %s86
    %s88 = scalar_lea.smem [#allocation2], 0
    %89 = sst [smem:[%s88]] %s87
    // Predicated region
    $region10: #{tpu_custom_call.1} parent=1 // pred_check
      _
    $region11: #{tpu_custom_call.1} parent=1 // pred_check_branch
      %91 = sbr.rel (0) target = $region13
    $region12: #{tpu_custom_call.1} parent=1 // pred_region
      %s93 = ssub.s32 16, 16
      %94 = vsyncadd [#allocation3], %s93
      %97 = dma.smem_to_hbm [#allocation2], 16, %s2, [#allocation3]
    $region13: #{tpu_custom_call.1} parent=1 // pred_fallthru
      _
    // Predicated region
    $region14: #{tpu_custom_call.1} parent=1 // pred_check
      _
    $region15: #{tpu_custom_call.1} parent=1 // pred_check_branch
      %99 = sbr.rel (0) target = $region17
    $region16: #{tpu_custom_call.1} parent=1 // pred_region
      %100 = dma.done [#allocation3], 16
    $region17: #{tpu_custom_call.1} parent=1 // pred_fallthru
      _
    %101 = sfence
    %102 = vsyncpa [#allocation3], 1

</llo_original>
